<compile_context>
chip_gen: v6e
topology: v6e:2x2x1
jax: 0.10.0
libtpu: 0.0.40
codegen_flags: <defaults>
</compile_context>

<pallas_src>
import functools

import jax
import jax.numpy as jnp
from jax.experimental import pallas as pl
from jax.experimental.pallas import tpu as pltpu


_LAYER_NAMES = ("l1", "l2", "l3", "l4", "l5")


def _mlp_kernel(x_ref, w_ref, b_ref, o_ref):
    """Fused 5-layer MLP forward for one batch tile.

    x_ref: [Bt, D]   f32   (batch-major, straight from HBM)
    w_ref: [L, P, P] bf16  (zero-padded torch-layout weights, P = max(64, D))
    b_ref: [L, P, 1] f32   (zero-padded biases)
    o_ref: [1, Bt]   f32   (lane-dense output slab; row 0 of the last layer)
    """
    d_in = x_ref.shape[1]
    x = x_ref[...].astype(jnp.bfloat16)                   # bf16 cast in-kernel

    # Layer 1: contract the feature axis of both operands -> [P, Bt] with the
    # batch on lanes; no explicit transpose of the large activation needed.
    acc = jnp.einsum("od,bd->ob", w_ref[0][:, :d_in], x,
                     preferred_element_type=jnp.float32)
    acc = acc + b_ref[0]                                  # [P, 1] lane-broadcast
    h = jnp.maximum(acc, 0.0).astype(jnp.bfloat16)        # [P, Bt]

    # Layers 2..5.  Zero-padded weight rows/cols + zero bias keep the padded
    # rows of h exactly 0 through every ReLU, so padding stays inert.
    # Dropout(p=0.5) between layer 3's ReLU and layer 4 is eval-mode identity.
    for l in range(1, 5):
        acc = jnp.dot(w_ref[l], h, preferred_element_type=jnp.float32)
        acc = acc + b_ref[l]
        if l < 4:
            h = jnp.maximum(acc, 0.0).astype(jnp.bfloat16)
        else:
            h = acc                                       # final layer: no ReLU, f32

    o_ref[...] = h[0:1, :].astype(o_ref.dtype)            # row 0 = Linear(8,1) output


def _default_block_b(B, D):
    """Pick a lane-tile width.

    Big enough (<= 8192) to amortize the ~0.35us / ~600-cycle per-grid-step
    pipeline overhead, small enough that the double-buffered [block_b, D] f32
    input tile plus a handful of [P, block_b] f32 activation slabs stay under
    ~12 MiB (inside the v5e 16 MiB scoped-VMEM default; v6e/v7x have more),
    and >= 2 tiles whenever B allows it so v7x megacore has work for both TCs.
    """
    P = max(64, D)
    vmem_budget = 12 * 1024 * 1024
    bytes_per_lane = 2 * D * 4 + 8 * P * 4     # 2x-buffered x tile + ~8 f32 act slabs
    cap = max(128, min(8192, (vmem_budget // bytes_per_lane) // 128 * 128))
    two_tiles = ((pl.cdiv(B, 2) + 127) // 128) * 128
    return int(min(cap, max(128, two_tiles)))


def _pack_params(params, D):
    """Pack torch-layout (W [out,in], b [out,1]) into zero-padded resident slabs."""
    P = max(64, D)
    wslab = jnp.zeros((len(_LAYER_NAMES), P, P), jnp.bfloat16)
    bslab = jnp.zeros((len(_LAYER_NAMES), P, 1), jnp.float32)
    for l, name in enumerate(_LAYER_NAMES):
        w, b = params[name]
        out_f, in_f = w.shape
        wslab = wslab.at[l, :out_f, :in_f].set(w.astype(jnp.bfloat16))
        bslab = bslab.at[l, :out_f, :].set(jnp.reshape(b, (out_f, 1)).astype(jnp.float32))
    return wslab, bslab


@functools.partial(jax.jit, static_argnames=("block_b",))
def _forward(x, wslab, bslab, *, block_b):
    B, D = x.shape
    n_layers, P, _ = wslab.shape
    n_tiles = pl.cdiv(B, block_b)

    out = pl.pallas_call(
        _mlp_kernel,
        out_shape=jax.ShapeDtypeStruct((1, B), jnp.float32),
        grid_spec=pltpu.PrefetchScalarGridSpec(
            num_scalar_prefetch=0,
            grid=(n_tiles,),
            in_specs=[
                # x: one [block_b, D] batch tile per grid step.  A partial last
                # tile is handled by Pallas (OOB read padding / masked store);
                # garbage lanes never mix across the batch axis and are sliced
                # off by the output BlockSpec mask.
                pl.BlockSpec((block_b, D), lambda i: (i, 0)),
                # Weight / bias slabs: constant index maps -> resident in VMEM,
                # never re-DMA'd across batch tiles.
                pl.BlockSpec((n_layers, P, P), lambda i: (0, 0, 0)),
                pl.BlockSpec((n_layers, P, 1), lambda i: (0, 0, 0)),
            ],
            out_specs=pl.BlockSpec((1, block_b), lambda i: (0, i)),
        ),
        compiler_params=pltpu.CompilerParams(
            # Batch tiles are independent -> v7x megacore shards them across
            # both TensorCores.
            dimension_semantics=("parallel",)),
    )(x, wslab, bslab)

    # Lane-dense [1, B] slab back to the module's [B, 1] contract.
    return jnp.transpose(out)


def dfmodel_forward(x, params, *, block_b=None):
    """x: [B, D] float32.  params: name -> (W [out,in], b [out,1]).  Returns [B, 1]."""
    B, D = x.shape
    if block_b is None:
        block_b = _default_block_b(B, D)
    assert block_b % 128 == 0, "block_b must be a multiple of 128 (lane width)"
    wslab, bslab = _pack_params(params, D)
    return _forward(x, wslab, bslab, block_b=block_b)


def init_params(key, input_shape):
    """Deterministic init matching nn.Linear (W stored [out, in], b stored [out, 1])."""
    dims = [(input_shape, 16), (16, 64), (64, 32), (32, 8), (8, 1)]
    params = {}
    for name, (fan_in, fan_out) in zip(_LAYER_NAMES, dims):
        key, kw, kb = jax.random.split(key, 3)
        bound = 1.0 / jnp.sqrt(fan_in)
        w = jax.random.uniform(kw, (fan_out, fan_in), jnp.float32, -bound, bound)
        b = jax.random.uniform(kb, (fan_out, 1), jnp.float32, -bound, bound)
        params[name] = (w, b)
    return params


def reference_forward(x, params):
    """Pure-JAX reference mirroring the kernel math (bf16 MXU feed, f32 accumulate)."""
    h = jnp.transpose(x).astype(jnp.bfloat16)             # [D, B]
    for i, name in enumerate(_LAYER_NAMES):
        w, b = params[name]
        h = jnp.dot(w.astype(jnp.bfloat16), h,
                    preferred_element_type=jnp.float32) + jnp.reshape(b, (-1, 1))
        if i < 4:
            h = jnp.maximum(h, 0.0).astype(jnp.bfloat16)
    return jnp.transpose(h)                               # [B, 1]


if __name__ == "__main__":
    key = jax.random.PRNGKey(0)
    k_params, k_x = jax.random.split(key)

    B, D = 512, 32   # auto-picks block_b=256 -> two tiles, both v7x TCs get work
    params = init_params(k_params, D)
    x = jax.random.normal(k_x, (B, D), jnp.float32)

    out = dfmodel_forward(x, params)
    out = jax.block_until_ready(out)

    ref = reference_forward(x, params)
    assert out.shape == (B, 1), out.shape
    max_diff = float(jnp.max(jnp.abs(out - ref)))
    assert jnp.allclose(out, ref, atol=1e-4, rtol=1e-4), (
        f"mismatch vs reference: max abs diff {max_diff}")

    print("KERNEL_OK")
</pallas_src>

<mosaic_0001>
module attributes {stable_mosaic.version = 11 : i64} {
  func.func @_mlp_kernel(%arg0: i32, %arg1: memref<256x32xf32, #tpu.memory_space<vmem>>, %arg2: memref<5x64x64xbf16, #tpu.memory_space<vmem>>, %arg3: memref<5x64x1xf32, #tpu.memory_space<vmem>>, %arg4: memref<1x256xf32, #tpu.memory_space<vmem>>) attributes {dimension_semantics = [#tpu.dimension_semantics<parallel>], iteration_bounds = array<i64: 2>, scalar_prefetch = 0 : i64, scratch_operands = 0 : i64, tpu.core_type = #tpu.core_type<tc>, window_params = [{transform_indices = @transform_0, window_bounds = array<i64: 256, 32>}, {pipeline_mode = #tpu.pipeline_mode<synchronous>, transform_indices = @transform_1, window_bounds = array<i64: 5, 64, 64>}, {pipeline_mode = #tpu.pipeline_mode<synchronous>, transform_indices = @transform_2, window_bounds = array<i64: 5, 64, 1>}, {transform_indices = @transform_3, window_bounds = array<i64: 1, 256>}]} {
    %c0 = arith.constant 0 : index
    %c0_0 = arith.constant 0 : index
    %0 = vector.load %arg1[%c0, %c0_0] : memref<256x32xf32, #tpu.memory_space<vmem>>, vector<256x32xf32>
    %1 = arith.truncf %0 : vector<256x32xf32> to vector<256x32xbf16>
    %c0_1 = arith.constant 0 : index
    %c0_2 = arith.constant 0 : index
    %c0_3 = arith.constant 0 : index
    %2 = vector.load %arg2[%c0_1, %c0_2, %c0_3] : memref<5x64x64xbf16, #tpu.memory_space<vmem>>, vector<1x64x64xbf16>
    %3 = vector.shape_cast %2 : vector<1x64x64xbf16> to vector<64x64xbf16>
    %4 = vector.extract_strided_slice %3 {offsets = [0, 0], sizes = [64, 32], strides = [1, 1]} : vector<64x64xbf16> to vector<64x32xbf16>
    "tpu.trace_start"() <{level = 10 : i32, message = "od,bd->ob"}> : () -> ()
    %cst = arith.constant dense<0.000000e+00> : vector<64x256xf32>
    %5 = tpu.matmul %4, %1, %cst {dimension_numbers = #tpu.dot_dimension_numbers<[1], [1], [0], [0], [0, 0, 1, 0], [], []>} : vector<64x32xbf16>, vector<256x32xbf16>, vector<64x256xf32> -> vector<64x256xf32>
    "tpu.trace_stop"() : () -> ()
    %c0_4 = arith.constant 0 : index
    %c0_5 = arith.constant 0 : index
    %c0_6 = arith.constant 0 : index
    %6 = vector.load %arg3[%c0_4, %c0_5, %c0_6] : memref<5x64x1xf32, #tpu.memory_space<vmem>>, vector<1x64x1xf32>
    %7 = vector.shape_cast %6 : vector<1x64x1xf32> to vector<64x1xf32>
    %8 = vector.broadcast %7 : vector<64x1xf32> to vector<64x256xf32>
    %9 = arith.addf %5, %8 : vector<64x256xf32>
    %cst_7 = arith.constant 0.000000e+00 : f32
    %10 = vector.broadcast %cst_7 : f32 to vector<64x256xf32>
    %11 = arith.maximumf %9, %10 : vector<64x256xf32>
    %12 = arith.truncf %11 : vector<64x256xf32> to vector<64x256xbf16>
    %c1 = arith.constant 1 : index
    %c0_8 = arith.constant 0 : index
    %c0_9 = arith.constant 0 : index
    %13 = vector.load %arg2[%c1, %c0_8, %c0_9] : memref<5x64x64xbf16, #tpu.memory_space<vmem>>, vector<1x64x64xbf16>
    %14 = vector.shape_cast %13 : vector<1x64x64xbf16> to vector<64x64xbf16>
    %cst_10 = arith.constant dense<0.000000e+00> : vector<64x256xf32>
    %15 = tpu.matmul %14, %12, %cst_10 {dimension_numbers = #tpu.dot_dimension_numbers<[1], [0], [0], [1], [0, 0, 1, 1], [], []>} : vector<64x64xbf16>, vector<64x256xbf16>, vector<64x256xf32> -> vector<64x256xf32>
    %c1_11 = arith.constant 1 : index
    %c0_12 = arith.constant 0 : index
    %c0_13 = arith.constant 0 : index
    %16 = vector.load %arg3[%c1_11, %c0_12, %c0_13] : memref<5x64x1xf32, #tpu.memory_space<vmem>>, vector<1x64x1xf32>
    %17 = vector.shape_cast %16 : vector<1x64x1xf32> to vector<64x1xf32>
    %18 = vector.broadcast %17 : vector<64x1xf32> to vector<64x256xf32>
    %19 = arith.addf %15, %18 : vector<64x256xf32>
    %cst_14 = arith.constant 0.000000e+00 : f32
    %20 = vector.broadcast %cst_14 : f32 to vector<64x256xf32>
    %21 = arith.maximumf %19, %20 : vector<64x256xf32>
    %22 = arith.truncf %21 : vector<64x256xf32> to vector<64x256xbf16>
    %c2 = arith.constant 2 : index
    %c0_15 = arith.constant 0 : index
    %c0_16 = arith.constant 0 : index
    %23 = vector.load %arg2[%c2, %c0_15, %c0_16] : memref<5x64x64xbf16, #tpu.memory_space<vmem>>, vector<1x64x64xbf16>
    %24 = vector.shape_cast %23 : vector<1x64x64xbf16> to vector<64x64xbf16>
    %cst_17 = arith.constant dense<0.000000e+00> : vector<64x256xf32>
    %25 = tpu.matmul %24, %22, %cst_17 {dimension_numbers = #tpu.dot_dimension_numbers<[1], [0], [0], [1], [0, 0, 1, 1], [], []>} : vector<64x64xbf16>, vector<64x256xbf16>, vector<64x256xf32> -> vector<64x256xf32>
    %c2_18 = arith.constant 2 : index
    %c0_19 = arith.constant 0 : index
    %c0_20 = arith.constant 0 : index
    %26 = vector.load %arg3[%c2_18, %c0_19, %c0_20] : memref<5x64x1xf32, #tpu.memory_space<vmem>>, vector<1x64x1xf32>
    %27 = vector.shape_cast %26 : vector<1x64x1xf32> to vector<64x1xf32>
    %28 = vector.broadcast %27 : vector<64x1xf32> to vector<64x256xf32>
    %29 = arith.addf %25, %28 : vector<64x256xf32>
    %cst_21 = arith.constant 0.000000e+00 : f32
    %30 = vector.broadcast %cst_21 : f32 to vector<64x256xf32>
    %31 = arith.maximumf %29, %30 : vector<64x256xf32>
    %32 = arith.truncf %31 : vector<64x256xf32> to vector<64x256xbf16>
    %c3 = arith.constant 3 : index
    %c0_22 = arith.constant 0 : index
    %c0_23 = arith.constant 0 : index
    %33 = vector.load %arg2[%c3, %c0_22, %c0_23] : memref<5x64x64xbf16, #tpu.memory_space<vmem>>, vector<1x64x64xbf16>
    %34 = vector.shape_cast %33 : vector<1x64x64xbf16> to vector<64x64xbf16>
    %cst_24 = arith.constant dense<0.000000e+00> : vector<64x256xf32>
    %35 = tpu.matmul %34, %32, %cst_24 {dimension_numbers = #tpu.dot_dimension_numbers<[1], [0], [0], [1], [0, 0, 1, 1], [], []>} : vector<64x64xbf16>, vector<64x256xbf16>, vector<64x256xf32> -> vector<64x256xf32>
    %c3_25 = arith.constant 3 : index
    %c0_26 = arith.constant 0 : index
    %c0_27 = arith.constant 0 : index
    %36 = vector.load %arg3[%c3_25, %c0_26, %c0_27] : memref<5x64x1xf32, #tpu.memory_space<vmem>>, vector<1x64x1xf32>
    %37 = vector.shape_cast %36 : vector<1x64x1xf32> to vector<64x1xf32>
    %38 = vector.broadcast %37 : vector<64x1xf32> to vector<64x256xf32>
    %39 = arith.addf %35, %38 : vector<64x256xf32>
    %cst_28 = arith.constant 0.000000e+00 : f32
    %40 = vector.broadcast %cst_28 : f32 to vector<64x256xf32>
    %41 = arith.maximumf %39, %40 : vector<64x256xf32>
    %42 = arith.truncf %41 : vector<64x256xf32> to vector<64x256xbf16>
    %c4 = arith.constant 4 : index
    %c0_29 = arith.constant 0 : index
    %c0_30 = arith.constant 0 : index
    %43 = vector.load %arg2[%c4, %c0_29, %c0_30] : memref<5x64x64xbf16, #tpu.memory_space<vmem>>, vector<1x64x64xbf16>
    %44 = vector.shape_cast %43 : vector<1x64x64xbf16> to vector<64x64xbf16>
    %cst_31 = arith.constant dense<0.000000e+00> : vector<64x256xf32>
    %45 = tpu.matmul %44, %42, %cst_31 {dimension_numbers = #tpu.dot_dimension_numbers<[1], [0], [0], [1], [0, 0, 1, 1], [], []>} : vector<64x64xbf16>, vector<64x256xbf16>, vector<64x256xf32> -> vector<64x256xf32>
    %c4_32 = arith.constant 4 : index
    %c0_33 = arith.constant 0 : index
    %c0_34 = arith.constant 0 : index
    %46 = vector.load %arg3[%c4_32, %c0_33, %c0_34] : memref<5x64x1xf32, #tpu.memory_space<vmem>>, vector<1x64x1xf32>
    %47 = vector.shape_cast %46 : vector<1x64x1xf32> to vector<64x1xf32>
    %48 = vector.broadcast %47 : vector<64x1xf32> to vector<64x256xf32>
    %49 = arith.addf %45, %48 : vector<64x256xf32>
    %50 = vector.extract_strided_slice %49 {offsets = [0, 0], sizes = [1, 256], strides = [1, 1]} : vector<64x256xf32> to vector<1x256xf32>
    %c0_35 = arith.constant 0 : index
    %c0_36 = arith.constant 0 : index
    %51 = vector.load %arg4[%c0_35, %c0_36] : memref<1x256xf32, #tpu.memory_space<vmem>>, vector<1x256xf32>
    tpu.vector_store %arg4[%c0_35, %c0_36], %50 {strides = array<i32>} : memref<1x256xf32, #tpu.memory_space<vmem>>, vector<1x256xf32>,
    return
  }
  func.func @transform_0(%arg0: i32) -> (i32, i32) {
    %c0_i32 = arith.constant 0 : i32
    %c0_i32_0 = arith.constant 0 : i32
    return %arg0, %c0_i32 : i32, i32
  }
  func.func @transform_1(%arg0: i32) -> (i32, i32, i32) {
    %c0_i32 = arith.constant 0 : i32
    %c0_i32_0 = arith.constant 0 : i32
    %c0_i32_1 = arith.constant 0 : i32
    %c0_i32_2 = arith.constant 0 : i32
    return %c0_i32, %c0_i32_0, %c0_i32_1 : i32, i32, i32
  }
  func.func @transform_2(%arg0: i32) -> (i32, i32, i32) {
    %c0_i32 = arith.constant 0 : i32
    %c0_i32_0 = arith.constant 0 : i32
    %c0_i32_1 = arith.constant 0 : i32
    %c0_i32_2 = arith.constant 0 : i32
    return %c0_i32, %c0_i32_0, %c0_i32_1 : i32, i32, i32
  }
  func.func @transform_3(%arg0: i32) -> (i32, i32) {
    %c0_i32 = arith.constant 0 : i32
    %c0_i32_0 = arith.constant 0 : i32
    return %c0_i32, %arg0 : i32, i32
  }
}

</mosaic_0001>

<llo_original>
// kernel: _forward.1
$region0: #{_forward.1}
  #allocation0 [shape = 'u32[]', space=smem, size = 0x4, offset = 0x4, fixed_abs, tag = 'smem constant byte address 0x4 - core index']
  #allocation1 [shape = 'u32[144,128]{1,0:T(1,128)}', space=vmem, size = 0x12000, scoped, tag = 'internal scratch']
  %s0 = inlined_call_operand.vmem [shape: f32[512,32], index: 0, kind: input, shape index: {}]
  %s1 = inlined_call_operand.vmem [shape: bf16[5,64,64], index: 1, kind: input, shape index: {}]
  %s2 = inlined_call_operand.vmem [shape: f32[5,64,1], index: 2, kind: input, shape index: {}]
  %s3 = inlined_call_operand.hbm [shape: f32[1,512], index: 3, kind: output, shape index: {}]
  %s4 = sld [smem:[#allocation0]]
  $region45: #{_forward.1} parent=0
    _
  %s6 = ssub.s32 1, %s4
  %s7 = scalar_select 0, %s6, %s4
  $region1: #{_forward.1} parent=0
    #allocation2 [shape = 'u8[2048]{0}', space=vmem, size = 0x800, scoped, tag = 'output window, operand 0']
    #allocation3 [shape = 's32[2]{0}', space=sflag, size = 0x8, scoped, tag = 'scoped memory for _forward.1']
    %8 = vsyncpa [#allocation3], 0
    %s9 = scalar_lea.sflag [#allocation3], 1
    %10 = vsyncpa %s9, 0
    loop: start=0, step=1, limit=4
    $region2: #{_forward.1} parent=1 // loop_pre_header
      _
    $region3: #{_forward.1} parent=1 // loop_header
      %s12 = sphi 0, %s16
      %p13 = scmp.ge.s32.totalorder %s12, 4
      %s22 = sphi 0, %s24
      %s25 = sphi 0, %s22
      %s26 = sphi 0, %s25
      %s42 = sphi 0, %s26
      %s46 = sphi 0, %s46
      %s48 = sphi 0, %s46
      %s49 = sphi 0, %s48
      %s63 = sphi 0, %s49
      %s67 = sphi 0, %s67
      %s69 = sphi 0, %s67
      %s70 = sphi 0, %s69
      %s84 = sphi 0, %s70
      %s90 = sphi 0, %s92
      %s93 = sphi 0, %s90
      %s94 = sphi 0, %s93
      %s110 = sphi 0, %s94
    $region4: #{_forward.1} parent=1 // loop_header_branch
      %15 = sbr.rel (%p13) target = $region8
    $region5: #{_forward.1} parent=1 // loop_body
      %s17 = ssub.s32 %s12, 1
      %s18 = ssub.s32 %s12, 2
      %s19 = sadd.s32 %s12, 1
      %s20 = ssub.s32 %s12, %s19
      %p21 = scmp.eq.s32.totalorder %s20, 0
      %s23 = sadd.s32 %s22, 1
      %s24 = scalar_select %p21, %s22, %s23
      %p27 = pneg %p21
      %p28 = scmp.eq.s32.totalorder %s12, 1
      %p29 = por %p27, %p28
      %p30 = scmp.ne.s32.totalorder %s22, %s25
      %p31 = scmp.eq.s32.totalorder %s12, 0
      %p32 = por %p30, %p31
      %p33 = scmp.ne.s32.totalorder %s22, %s25
      %p34 = scmp.eq.s32.totalorder %s17, 1
      %p35 = por %p33, %p34
      %p36 = scmp.ne.s32.totalorder %s25, %s26
      %p37 = scmp.eq.s32.totalorder %s17, 0
      %p38 = por %p36, %p37
      %p39 = scmp.ne.s32.totalorder %s25, %s26
      %p40 = scmp.eq.s32.totalorder %s18, 1
      %p41 = por %p39, %p40
      %p43 = scmp.ne.s32.totalorder %s26, %s42
      %p44 = scmp.eq.s32.totalorder %s18, 0
      %p45 = por %p43, %p44
      %s47 = sadd.s32 %s46, 1
      %p50 = scmp.eq.s32.totalorder %s12, 1
      %p51 = scmp.ne.s32.totalorder %s46, %s48
      %p52 = scmp.eq.s32.totalorder %s12, 0
      %p53 = por %p51, %p52
      %p54 = scmp.ne.s32.totalorder %s46, %s48
      %p55 = scmp.eq.s32.totalorder %s17, 1
      %p56 = por %p54, %p55
      %p57 = scmp.ne.s32.totalorder %s48, %s49
      %p58 = scmp.eq.s32.totalorder %s17, 0
      %p59 = por %p57, %p58
      %p60 = scmp.ne.s32.totalorder %s48, %s49
      %p61 = scmp.eq.s32.totalorder %s18, 1
      %p62 = por %p60, %p61
      %p64 = scmp.ne.s32.totalorder %s49, %s63
      %p65 = scmp.eq.s32.totalorder %s18, 0
      %p66 = por %p64, %p65
      %s68 = sadd.s32 %s67, 1
      %p71 = scmp.eq.s32.totalorder %s12, 1
      %p72 = scmp.ne.s32.totalorder %s67, %s69
      %p73 = scmp.eq.s32.totalorder %s12, 0
      %p74 = por %p72, %p73
      %p75 = scmp.ne.s32.totalorder %s67, %s69
      %p76 = scmp.eq.s32.totalorder %s17, 1
      %p77 = por %p75, %p76
      %p78 = scmp.ne.s32.totalorder %s69, %s70
      %p79 = scmp.eq.s32.totalorder %s17, 0
      %p80 = por %p78, %p79
      %p81 = scmp.ne.s32.totalorder %s69, %s70
      %p82 = scmp.eq.s32.totalorder %s18, 1
      %p83 = por %p81, %p82
      %p85 = scmp.ne.s32.totalorder %s70, %s84
      %p86 = scmp.eq.s32.totalorder %s18, 0
      %p87 = por %p85, %p86
      %s88 = ssub.s32 %s12, %s19
      %p89 = scmp.eq.s32.totalorder %s88, 0
      %s91 = sadd.s32 %s90, 1
      %s92 = scalar_select %p89, %s90, %s91
      %p95 = pneg %p89
      %p96 = scmp.eq.s32.totalorder %s12, 1
      %p97 = por %p95, %p96
      %p98 = scmp.ne.s32.totalorder %s90, %s93
      %p99 = scmp.eq.s32.totalorder %s12, 0
      %p100 = por %p98, %p99
      %p101 = scmp.ne.s32.totalorder %s90, %s93
      %p102 = scmp.eq.s32.totalorder %s17, 1
      %p103 = por %p101, %p102
      %p104 = scmp.ne.s32.totalorder %s93, %s94
      %p105 = scmp.eq.s32.totalorder %s17, 0
      %p106 = por %p104, %p105
      %p107 = scmp.ne.s32.totalorder %s93, %s94
      %p108 = scmp.eq.s32.totalorder %s18, 1
      %p109 = por %p107, %p108
      %p111 = scmp.ne.s32.totalorder %s94, %s110
      %p112 = scmp.eq.s32.totalorder %s18, 0
      %p113 = por %p111, %p112
      %p114 = scmp.le.s32.totalorder 1, %s12
      %p115 = scmp.lt.s32.totalorder %s12, 3
      %p116 = pnand %p114, %p115
      %p117 = pneg %p116
      // Predicated region
      $region9: #{_forward.1} parent=5 // pred_check
        _
      $region10: #{_forward.1} parent=5 // pred_check_branch
        %119 = sbr.rel (%p116) target = $region12
      $region11: #{_forward.1} parent=5 // pred_region
        %s120 = ssub.s32 %s12, 1
        // Predicated region
        $region13: #{_forward.1} parent=11 // pred_check
          %p121 = pneg %p59
        $region14: #{_forward.1} parent=11 // pred_check_branch
          %123 = sbr.rel (%p121) target = $region16
        $region15: #{_forward.1} parent=11 // pred_region
          _
        $region16: #{_forward.1} parent=11 // pred_fallthru
          _
        // Predicated region
        $region17: #{_forward.1} parent=11 // pred_check
          %p124 = pneg %p80
        $region18: #{_forward.1} parent=11 // pred_check_branch
          %126 = sbr.rel (%p124) target = $region20
        $region19: #{_forward.1} parent=11 // pred_region
          _
        $region20: #{_forward.1} parent=11 // pred_fallthru
          _
      $region12: #{_forward.1} parent=5 // pred_fallthru
        _
      %p127 = scmp.lt.s32.totalorder %s12, 2
      // Predicated region
      $region21: #{_forward.1} parent=5 // pred_check
        %p128 = pneg %p127
      $region22: #{_forward.1} parent=5 // pred_check_branch
        %130 = sbr.rel (%p128) target = $region24
      $region23: #{_forward.1} parent=5 // pred_region
        // Predicated region
        $region25: #{_forward.1} parent=23 // pred_check
          %p131 = pneg %p32
        $region26: #{_forward.1} parent=23 // pred_check_branch
          %133 = sbr.rel (%p131) target = $region28
        $region27: #{_forward.1} parent=23 // pred_region
          %s134 = smul.u32 32, %s12
          %p135 = scmp.lt.s32.totalorder %s134, 63
          %s136 = scalar_select %p135, %s134, 63
          %s137 = smul.addr %s136, 8
          %s138 = scalar_lea.vmem %s0, %s137
          %s139 = smul.u32 32, %s12
        $region28: #{_forward.1} parent=23 // pred_fallthru
          _
      $region24: #{_forward.1} parent=5 // pred_fallthru
        _
      %p140 = scmp.le.s32.totalorder 1, %s12
      %p141 = scmp.lt.s32.totalorder %s12, 3
      %p142 = pnand %p140, %p141
      %p143 = pneg %p142
      // Predicated region
      $region29: #{_forward.1} parent=5 // pred_check
        _
      $region30: #{_forward.1} parent=5 // pred_check_branch
        %145 = sbr.rel (%p142) target = $region32
      $region31: #{_forward.1} parent=5 // pred_region
        %s146 = ssub.s32 %s12, 1
        %s147 = smul.u32 32, %s17
        %p148 = scmp.lt.s32.totalorder %s147, 63
        %s149 = scalar_select %p148, %s147, 63
        %s150 = smul.addr %s149, 8
        %s151 = scalar_lea.vmem %s0, %s150
        %p152 = pneg %p38
        %p153 = pneg %p35
        %p154 = pneg %p59
        %p155 = pneg %p56
        %p156 = pneg %p80
        %p157 = pneg %p77
        %p158 = pneg %p106
        %p159 = pneg %p103
        %s160 = sand.u32 %s93, 1
        %s161 = scalar_lea.sflag [#allocation3], %s160
        %s162 = sand.u32 %s93, 1
        %s163 = smul.addr %s162, 2
        %s164 = scalar_lea.vmem [#allocation2], %s163
        %s165 = smul.u32 32, %s17
        %p166 = scmp.lt.s32.totalorder %s165, 63
        %s167 = scalar_select %p166, %s165, 63
        %s168 = smul.addr %s167, 8
        %s169 = scalar_lea.vmem %s0, %s168
        %s170 = smul.u32 32, %s17
        %s171 = smul.u32 2, %s17
        %v173 = vld [vmem:[%s169] sm:$0xff]
        %v174 = vld [vmem:[%s169 + $0x8] sm:$0xff]
        %v175 = vld [vmem:[%s169 + $0x10] sm:$0xff]
        %v176 = vld [vmem:[%s169 + $0x18] sm:$0xff]
        %v177 = vld [vmem:[%s169 + $0x20] sm:$0xff]
        %v178 = vld [vmem:[%s169 + $0x28] sm:$0xff]
        %v179 = vld [vmem:[%s169 + $0x30] sm:$0xff]
        %v180 = vld [vmem:[%s169 + $0x38] sm:$0xff]
        %v181 = vld [vmem:[%s169 + $0x40] sm:$0xff]
        %v182 = vld [vmem:[%s169 + $0x48] sm:$0xff]
        %v183 = vld [vmem:[%s169 + $0x50] sm:$0xff]
        %v184 = vld [vmem:[%s169 + $0x58] sm:$0xff]
        %v185 = vld [vmem:[%s169 + $0x60] sm:$0xff]
        %v186 = vld [vmem:[%s169 + $0x68] sm:$0xff]
        %v187 = vld [vmem:[%s169 + $0x70] sm:$0xff]
        %v188 = vld [vmem:[%s169 + $0x78] sm:$0xff]
        %v189 = vld [vmem:[%s169 + $0x80] sm:$0xff]
        %v190 = vld [vmem:[%s169 + $0x88] sm:$0xff]
        %v191 = vld [vmem:[%s169 + $0x90] sm:$0xff]
        %v192 = vld [vmem:[%s169 + $0x98] sm:$0xff]
        %v193 = vld [vmem:[%s169 + $0xa0] sm:$0xff]
        %v194 = vld [vmem:[%s169 + $0xa8] sm:$0xff]
        %v195 = vld [vmem:[%s169 + $0xb0] sm:$0xff]
        %v196 = vld [vmem:[%s169 + $0xb8] sm:$0xff]
        %v197 = vld [vmem:[%s169 + $0xc0] sm:$0xff]
        %v198 = vld [vmem:[%s169 + $0xc8] sm:$0xff]
        %v199 = vld [vmem:[%s169 + $0xd0] sm:$0xff]
        %v200 = vld [vmem:[%s169 + $0xd8] sm:$0xff]
        %v201 = vld [vmem:[%s169 + $0xe0] sm:$0xff]
        %v202 = vld [vmem:[%s169 + $0xe8] sm:$0xff]
        %v203 = vld [vmem:[%s169 + $0xf0] sm:$0xff]
        %v204 = vld [vmem:[%s169 + $0xf8] sm:$0xff]
        %v205 = vpack.c.bf16 %v174, %v173
        %v206 = vpack.c.bf16 %v176, %v175
        %v207 = vpack.c.bf16 %v178, %v177
        %v208 = vpack.c.bf16 %v180, %v179
        %v209 = vpack.c.bf16 %v182, %v181
        %v210 = vpack.c.bf16 %v184, %v183
        %v211 = vpack.c.bf16 %v186, %v185
        %v212 = vpack.c.bf16 %v188, %v187
        %v213 = vpack.c.bf16 %v190, %v189
        %v214 = vpack.c.bf16 %v192, %v191
        %v215 = vpack.c.bf16 %v194, %v193
        %v216 = vpack.c.bf16 %v196, %v195
        %v217 = vpack.c.bf16 %v198, %v197
        %v218 = vpack.c.bf16 %v200, %v199
        %v219 = vpack.c.bf16 %v202, %v201
        %v220 = vpack.c.bf16 %v204, %v203
        %v221 = vld [vmem:[%s1] sm:$0xf]
        %v222 = vld [vmem:[%s1 + $0x4] sm:$0xf]
        %v223 = vld [vmem:[%s1 + $0x8] sm:$0xf]
        %v224 = vld [vmem:[%s1 + $0xc] sm:$0xf]
        %v225 = vld [vmem:[%s1 + $0x10] sm:$0xf]
        %v226 = vld [vmem:[%s1 + $0x14] sm:$0xf]
        %v227 = vld [vmem:[%s1 + $0x18] sm:$0xf]
        %v228 = vld [vmem:[%s1 + $0x1c] sm:$0xf]
        %v229 = vld [vmem:[%s2] sm:$0xff]
        %v230 = vld [vmem:[%s2 + $0x8] sm:$0xff]
        %v231 = vld [vmem:[%s2 + $0x10] sm:$0xff]
        %v232 = vld [vmem:[%s2 + $0x18] sm:$0xff]
        %v233 = vld [vmem:[%s2 + $0x20] sm:$0xff]
        %v234 = vld [vmem:[%s2 + $0x28] sm:$0xff]
        %v235 = vld [vmem:[%s2 + $0x30] sm:$0xff]
        %v236 = vld [vmem:[%s2 + $0x38] sm:$0xff]
        %238 = vset.pattern.permute.xlu0 0
        %239 = vperm.xlu0 %238, %v229
        %v240 = vpop.permute.xlu0 %239
        %243 = vset.pattern.permute.xlu0 0
        %244 = vperm.xlu0 %243, %v230
        %v245 = vpop.permute.xlu0 %244
        %248 = vset.pattern.permute.xlu0 0
        %249 = vperm.xlu0 %248, %v231
        %v250 = vpop.permute.xlu0 %249
        %253 = vset.pattern.permute.xlu0 0
        %254 = vperm.xlu0 %253, %v232
        %v255 = vpop.permute.xlu0 %254
        %258 = vset.pattern.permute.xlu0 0
        %259 = vperm.xlu0 %258, %v233
        %v260 = vpop.permute.xlu0 %259
        %263 = vset.pattern.permute.xlu0 0
        %264 = vperm.xlu0 %263, %v234
        %v265 = vpop.permute.xlu0 %264
        %268 = vset.pattern.permute.xlu0 0
        %269 = vperm.xlu0 %268, %v235
        %v270 = vpop.permute.xlu0 %269
        %273 = vset.pattern.permute.xlu0 0
        %274 = vperm.xlu0 %273, %v236
        %v275 = vpop.permute.xlu0 %274
        %v285 = vunpack.c.l.b16 %v221
        %v286 = vunpack.c.l.b16 %v222
        %v287 = vunpack.c.l.b16 %v223
        %v288 = vunpack.c.l.b16 %v224
        %v289 = vunpack.c.l.b16 %v225
        %v290 = vunpack.c.l.b16 %v226
        %v291 = vunpack.c.l.b16 %v227
        %v292 = vunpack.c.l.b16 %v228
        %v293 = vpack.c.b16 %v286, %v285
        %v294 = vpack.c.b16 %v288, %v287
        %v295 = vpack.c.b16 %v290, %v289
        %v296 = vpack.c.b16 %v292, %v291
        %vm297 = vcmask 261120
        %v299 = vsel %vm297, %v293, 0
        %v302 = vsel %vm297, %v294, 0
        %v305 = vsel %vm297, %v295, 0
        %v308 = vsel %vm297, %v296, 0
        %v311 = vsel %vm297, %v205, 0
        %v314 = vsel %vm297, %v206, 0
        %v317 = vsel %vm297, %v207, 0
        %v320 = vsel %vm297, %v208, 0
        %v323 = vsel %vm297, %v209, 0
        %v326 = vsel %vm297, %v210, 0
        %v329 = vsel %vm297, %v211, 0
        %v332 = vsel %vm297, %v212, 0
        %v335 = vsel %vm297, %v213, 0
        %v338 = vsel %vm297, %v214, 0
        %v341 = vsel %vm297, %v215, 0
        %v344 = vsel %vm297, %v216, 0
        %v347 = vsel %vm297, %v217, 0
        %v350 = vsel %vm297, %v218, 0
        %v353 = vsel %vm297, %v219, 0
        %v356 = vsel %vm297, %v220, 0
        %358 = vmatprep.subr.bf16.mxu0 0
        %359 = vmatpush1.bf16.xpose.msra.mxu0 %v332
        %360 = vmatprep.subr.bf16.mxu0 0
        %361 = vmatpush1.bf16.xpose.msra.mxu0 %v329
        %362 = vmatprep.subr.bf16.mxu0 0
        %363 = vmatpush1.bf16.xpose.msra.mxu0 %v326
        %364 = vmatprep.subr.bf16.mxu0 0
        %365 = vmatpush1.bf16.xpose.msra.mxu0 %v323
        %366 = vmatprep.subr.bf16.mxu0 0
        %367 = vmatpush1.bf16.xpose.msra.mxu0 %v320
        %368 = vmatprep.subr.bf16.mxu0 0
        %369 = vmatpush1.bf16.xpose.msra.mxu0 %v317
        %370 = vmatprep.subr.bf16.mxu0 0
        %371 = vmatpush1.bf16.xpose.msra.mxu0 %v314
        %372 = vmatprep.subr.bf16.mxu0 0
        %373 = vmatpush1.bf16.xpose.msra.mxu0 %v311
        %374 = vmatprep.subr.bf16.mxu0 0
        %375 = vmatpush2.bf16.xpose.msra.mxu0 %v356
        %376 = vmatprep.subr.bf16.mxu0 0
        %377 = vmatpush2.bf16.xpose.msra.mxu0 %v353
        %378 = vmatprep.subr.bf16.mxu0 0
        %379 = vmatpush2.bf16.xpose.msra.mxu0 %v350
        %380 = vmatprep.subr.bf16.mxu0 0
        %381 = vmatpush2.bf16.xpose.msra.mxu0 %v347
        %382 = vmatprep.subr.bf16.mxu0 0
        %383 = vmatpush2.bf16.xpose.msra.mxu0 %v344
        %384 = vmatprep.subr.bf16.mxu0 0
        %385 = vmatpush2.bf16.xpose.msra.mxu0 %v341
        %386 = vmatprep.subr.bf16.mxu0 0
        %387 = vmatpush2.bf16.xpose.msra.mxu0 %v338
        %388 = vmatprep.subr.bf16.mxu0 0
        %389 = vmatpush2.bf16.xpose.msra.mxu0 %v335
        %390 = vmatprep.mubr.bf16.mxu0 0
        %391 = vmatmul.mubr.bf16.gmra.mxu0 %v299
        %v392 = vpop.f32.mrf.mxu0
        %v393 = vadd.f32 %v240, %v392
        %v394 = vpop.f32.mrf.mxu0
        %v395 = vadd.f32 %v240, %v394
        %v396 = vpop.f32.mrf.mxu0
        %v397 = vadd.f32 %v245, %v396
        %v398 = vpop.f32.mrf.mxu0
        %v399 = vadd.f32 %v245, %v398
        %400 = vmatprep.mubr.bf16.mxu0 0
        %401 = vmatmul.mubr.bf16.gmra.mxu0 %v302
        %v402 = vpop.f32.mrf.mxu0
        %v403 = vadd.f32 %v250, %v402
        %v404 = vpop.f32.mrf.mxu0
        %v405 = vadd.f32 %v250, %v404
        %v406 = vpop.f32.mrf.mxu0
        %v407 = vadd.f32 %v255, %v406
        %v408 = vpop.f32.mrf.mxu0
        %v409 = vadd.f32 %v255, %v408
        %410 = vmatprep.mubr.bf16.mxu0 0
        %411 = vmatmul.mubr.bf16.gmra.mxu0 %v305
        %v412 = vpop.f32.mrf.mxu0
        %v413 = vadd.f32 %v260, %v412
        %v414 = vpop.f32.mrf.mxu0
        %v415 = vadd.f32 %v260, %v414
        %v416 = vpop.f32.mrf.mxu0
        %v417 = vadd.f32 %v265, %v416
        %v418 = vpop.f32.mrf.mxu0
        %v419 = vadd.f32 %v265, %v418
        %420 = vmatprep.mubr.bf16.mxu0 0
        %421 = vmatmul.mubr.bf16.gmra.mxu0 %v308
        %v422 = vpop.f32.mrf.mxu0
        %v423 = vadd.f32 %v270, %v422
        %v424 = vpop.f32.mrf.mxu0
        %v425 = vadd.f32 %v270, %v424
        %v426 = vpop.f32.mrf.mxu0
        %v427 = vadd.f32 %v275, %v426
        %v428 = vpop.f32.mrf.mxu0
        %v429 = vadd.f32 %v275, %v428
        %430 = vdwg.mxu0
        %v431 = vmax.f32 %v393, 0.0
        %v432 = vmax.f32 %v395, 0.0
        %v433 = vmax.f32 %v397, 0.0
        %v434 = vmax.f32 %v399, 0.0
        %v435 = vmax.f32 %v403, 0.0
        %v436 = vmax.f32 %v405, 0.0
        %v437 = vmax.f32 %v407, 0.0
        %v438 = vmax.f32 %v409, 0.0
        %v439 = vmax.f32 %v413, 0.0
        %v440 = vmax.f32 %v415, 0.0
        %v441 = vmax.f32 %v417, 0.0
        %v442 = vmax.f32 %v419, 0.0
        %v443 = vmax.f32 %v423, 0.0
        %v444 = vmax.f32 %v425, 0.0
        %v445 = vmax.f32 %v427, 0.0
        %v446 = vmax.f32 %v429, 0.0
        %v447 = vpack.c.bf16 %v433, %v431
        %v448 = vpack.c.bf16 %v434, %v432
        %v449 = vpack.c.bf16 %v437, %v435
        %v450 = vpack.c.bf16 %v438, %v436
        %v451 = vpack.c.bf16 %v441, %v439
        %v452 = vpack.c.bf16 %v442, %v440
        %v453 = vpack.c.bf16 %v445, %v443
        %v454 = vpack.c.bf16 %v446, %v444
        %s455 = scalar_lea.vmem %s1, 32
        %v456 = vld [vmem:[%s455] sm:$0xf]
        %v457 = vld [vmem:[%s455 + $0x4] sm:$0xf]
        %v458 = vld [vmem:[%s455 + $0x8] sm:$0xf]
        %v459 = vld [vmem:[%s455 + $0xc] sm:$0xf]
        %v460 = vld [vmem:[%s455 + $0x10] sm:$0xf]
        %v461 = vld [vmem:[%s455 + $0x14] sm:$0xf]
        %v462 = vld [vmem:[%s455 + $0x18] sm:$0xf]
        %v463 = vld [vmem:[%s455 + $0x1c] sm:$0xf]
        %s464 = scalar_lea.vmem %s2, 64
        %v465 = vld [vmem:[%s464] sm:$0xff]
        %v466 = vld [vmem:[%s464 + $0x8] sm:$0xff]
        %v467 = vld [vmem:[%s464 + $0x10] sm:$0xff]
        %v468 = vld [vmem:[%s464 + $0x18] sm:$0xff]
        %v469 = vld [vmem:[%s464 + $0x20] sm:$0xff]
        %v470 = vld [vmem:[%s464 + $0x28] sm:$0xff]
        %v471 = vld [vmem:[%s464 + $0x30] sm:$0xff]
        %v472 = vld [vmem:[%s464 + $0x38] sm:$0xff]
        %474 = vset.pattern.permute.xlu0 0
        %475 = vperm.xlu0 %474, %v465
        %v476 = vpop.permute.xlu0 %475
        %479 = vset.pattern.permute.xlu0 0
        %480 = vperm.xlu0 %479, %v466
        %v481 = vpop.permute.xlu0 %480
        %484 = vset.pattern.permute.xlu0 0
        %485 = vperm.xlu0 %484, %v467
        %v486 = vpop.permute.xlu0 %485
        %489 = vset.pattern.permute.xlu0 0
        %490 = vperm.xlu0 %489, %v468
        %v491 = vpop.permute.xlu0 %490
        %494 = vset.pattern.permute.xlu0 0
        %495 = vperm.xlu0 %494, %v469
        %v496 = vpop.permute.xlu0 %495
        %499 = vset.pattern.permute.xlu0 0
        %500 = vperm.xlu0 %499, %v470
        %v501 = vpop.permute.xlu0 %500
        %504 = vset.pattern.permute.xlu0 0
        %505 = vperm.xlu0 %504, %v471
        %v506 = vpop.permute.xlu0 %505
        %509 = vset.pattern.permute.xlu0 0
        %510 = vperm.xlu0 %509, %v472
        %v511 = vpop.permute.xlu0 %510
        %v521 = vunpack.c.l.b16 %v456
        %v522 = vunpack.c.l.b16 %v457
        %v523 = vunpack.c.l.b16 %v458
        %v524 = vunpack.c.l.b16 %v459
        %v525 = vunpack.c.l.b16 %v460
        %v526 = vunpack.c.l.b16 %v461
        %v527 = vunpack.c.l.b16 %v462
        %v528 = vunpack.c.l.b16 %v463
        %v529 = vpack.c.b16 %v522, %v521
        %v530 = vpack.c.b16 %v524, %v523
        %v531 = vpack.c.b16 %v526, %v525
        %v532 = vpack.c.b16 %v528, %v527
        %vm533 = vcmask 523264
        %v535 = vsel %vm533, %v529, 0
        %v538 = vsel %vm533, %v530, 0
        %v541 = vsel %vm533, %v531, 0
        %v544 = vsel %vm533, %v532, 0
        %546 = vmatprep.subr.bf16.mxu0 0
        %547 = vmatpush1.bf16.msra.mxu0 0
        %548 = vmatprep.subr.bf16.mxu0 0
        %549 = vmatpush1.bf16.msra.mxu0 0
        %550 = vmatprep.subr.bf16.mxu0 0
        %551 = vmatpush1.bf16.msra.mxu0 0
        %552 = vmatprep.subr.bf16.mxu0 0
        %553 = vmatpush1.bf16.msra.mxu0 0
        %554 = vmatprep.subr.bf16.mxu0 %v454
        %555 = vmatpush1.bf16.msra.mxu0 %v453
        %556 = vmatprep.subr.bf16.mxu0 %v452
        %557 = vmatpush1.bf16.msra.mxu0 %v451
        %558 = vmatprep.subr.bf16.mxu0 %v450
        %559 = vmatpush1.bf16.msra.mxu0 %v449
        %560 = vmatprep.subr.bf16.mxu0 %v448
        %561 = vmatpush1.bf16.msra.mxu0 %v447
        %562 = vmatprep.subr.bf16.mxu0 0
        %563 = vmatpush2.bf16.msra.mxu0 0
        %564 = vmatprep.subr.bf16.mxu0 0
        %565 = vmatpush2.bf16.msra.mxu0 0
        %566 = vmatprep.subr.bf16.mxu0 0
        %567 = vmatpush2.bf16.msra.mxu0 0
        %568 = vmatprep.subr.bf16.mxu0 0
        %569 = vmatpush2.bf16.msra.mxu0 0
        %570 = vmatprep.subr.bf16.mxu0 0
        %571 = vmatpush2.bf16.msra.mxu0 0
        %572 = vmatprep.subr.bf16.mxu0 0
        %573 = vmatpush2.bf16.msra.mxu0 0
        %574 = vmatprep.subr.bf16.mxu0 0
        %575 = vmatpush2.bf16.msra.mxu0 0
        %576 = vmatprep.subr.bf16.mxu0 0
        %577 = vmatpush2.bf16.msra.mxu0 0
        %578 = vmatprep.mubr.bf16.mxu0 0
        %579 = vmatmul.mubr.bf16.gmra.mxu0 %v535
        %v580 = vpop.f32.mrf.mxu0
        %v581 = vadd.f32 %v476, %v580
        %v582 = vpop.f32.mrf.mxu0
        %v583 = vadd.f32 %v476, %v582
        %v584 = vpop.f32.mrf.mxu0
        %v585 = vadd.f32 %v481, %v584
        %v586 = vpop.f32.mrf.mxu0
        %v587 = vadd.f32 %v481, %v586
        %588 = vmatprep.mubr.bf16.mxu0 0
        %589 = vmatmul.mubr.bf16.gmra.mxu0 %v538
        %v590 = vpop.f32.mrf.mxu0
        %v591 = vadd.f32 %v486, %v590
        %v592 = vpop.f32.mrf.mxu0
        %v593 = vadd.f32 %v486, %v592
        %v594 = vpop.f32.mrf.mxu0
        %v595 = vadd.f32 %v491, %v594
        %v596 = vpop.f32.mrf.mxu0
        %v597 = vadd.f32 %v491, %v596
        %598 = vmatprep.mubr.bf16.mxu0 0
        %599 = vmatmul.mubr.bf16.gmra.mxu0 %v541
        %v600 = vpop.f32.mrf.mxu0
        %v601 = vadd.f32 %v496, %v600
        %v602 = vpop.f32.mrf.mxu0
        %v603 = vadd.f32 %v496, %v602
        %v604 = vpop.f32.mrf.mxu0
        %v605 = vadd.f32 %v501, %v604
        %v606 = vpop.f32.mrf.mxu0
        %v607 = vadd.f32 %v501, %v606
        %608 = vmatprep.mubr.bf16.mxu0 0
        %609 = vmatmul.mubr.bf16.gmra.mxu0 %v544
        %v610 = vpop.f32.mrf.mxu0
        %v611 = vadd.f32 %v506, %v610
        %v612 = vpop.f32.mrf.mxu0
        %v613 = vadd.f32 %v506, %v612
        %v614 = vpop.f32.mrf.mxu0
        %v615 = vadd.f32 %v511, %v614
        %v616 = vpop.f32.mrf.mxu0
        %v617 = vadd.f32 %v511, %v616
        %618 = vdwg.mxu0
        %v619 = vmax.f32 %v581, 0.0
        %v620 = vmax.f32 %v583, 0.0
        %v621 = vmax.f32 %v585, 0.0
        %v622 = vmax.f32 %v587, 0.0
        %v623 = vmax.f32 %v591, 0.0
        %v624 = vmax.f32 %v593, 0.0
        %v625 = vmax.f32 %v595, 0.0
        %v626 = vmax.f32 %v597, 0.0
        %v627 = vmax.f32 %v601, 0.0
        %v628 = vmax.f32 %v603, 0.0
        %v629 = vmax.f32 %v605, 0.0
        %v630 = vmax.f32 %v607, 0.0
        %v631 = vmax.f32 %v611, 0.0
        %v632 = vmax.f32 %v613, 0.0
        %v633 = vmax.f32 %v615, 0.0
        %v634 = vmax.f32 %v617, 0.0
        %v635 = vpack.c.bf16 %v621, %v619
        %v636 = vpack.c.bf16 %v622, %v620
        %v637 = vpack.c.bf16 %v625, %v623
        %v638 = vpack.c.bf16 %v626, %v624
        %v639 = vpack.c.bf16 %v629, %v627
        %v640 = vpack.c.bf16 %v630, %v628
        %v641 = vpack.c.bf16 %v633, %v631
        %v642 = vpack.c.bf16 %v634, %v632
        %s643 = scalar_lea.vmem %s1, 64
        %v644 = vld [vmem:[%s643] sm:$0xf]
        %v645 = vld [vmem:[%s643 + $0x4] sm:$0xf]
        %v646 = vld [vmem:[%s643 + $0x8] sm:$0xf]
        %v647 = vld [vmem:[%s643 + $0xc] sm:$0xf]
        %v648 = vld [vmem:[%s643 + $0x10] sm:$0xf]
        %v649 = vld [vmem:[%s643 + $0x14] sm:$0xf]
        %v650 = vld [vmem:[%s643 + $0x18] sm:$0xf]
        %v651 = vld [vmem:[%s643 + $0x1c] sm:$0xf]
        %s652 = scalar_lea.vmem %s2, 128
        %v653 = vld [vmem:[%s652] sm:$0xff]
        %v654 = vld [vmem:[%s652 + $0x8] sm:$0xff]
        %v655 = vld [vmem:[%s652 + $0x10] sm:$0xff]
        %v656 = vld [vmem:[%s652 + $0x18] sm:$0xff]
        %v657 = vld [vmem:[%s652 + $0x20] sm:$0xff]
        %v658 = vld [vmem:[%s652 + $0x28] sm:$0xff]
        %v659 = vld [vmem:[%s652 + $0x30] sm:$0xff]
        %v660 = vld [vmem:[%s652 + $0x38] sm:$0xff]
        %662 = vset.pattern.permute.xlu0 0
        %663 = vperm.xlu0 %662, %v653
        %v664 = vpop.permute.xlu0 %663
        %667 = vset.pattern.permute.xlu0 0
        %668 = vperm.xlu0 %667, %v654
        %v669 = vpop.permute.xlu0 %668
        %672 = vset.pattern.permute.xlu0 0
        %673 = vperm.xlu0 %672, %v655
        %v674 = vpop.permute.xlu0 %673
        %677 = vset.pattern.permute.xlu0 0
        %678 = vperm.xlu0 %677, %v656
        %v679 = vpop.permute.xlu0 %678
        %682 = vset.pattern.permute.xlu0 0
        %683 = vperm.xlu0 %682, %v657
        %v684 = vpop.permute.xlu0 %683
        %687 = vset.pattern.permute.xlu0 0
        %688 = vperm.xlu0 %687, %v658
        %v689 = vpop.permute.xlu0 %688
        %692 = vset.pattern.permute.xlu0 0
        %693 = vperm.xlu0 %692, %v659
        %v694 = vpop.permute.xlu0 %693
        %697 = vset.pattern.permute.xlu0 0
        %698 = vperm.xlu0 %697, %v660
        %v699 = vpop.permute.xlu0 %698
        %v709 = vunpack.c.l.b16 %v644
        %v710 = vunpack.c.l.b16 %v645
        %v711 = vunpack.c.l.b16 %v646
        %v712 = vunpack.c.l.b16 %v647
        %v713 = vunpack.c.l.b16 %v648
        %v714 = vunpack.c.l.b16 %v649
        %v715 = vunpack.c.l.b16 %v650
        %v716 = vunpack.c.l.b16 %v651
        %v717 = vpack.c.b16 %v710, %v709
        %v718 = vpack.c.b16 %v712, %v711
        %v719 = vpack.c.b16 %v714, %v713
        %v720 = vpack.c.b16 %v716, %v715
        %v722 = vsel %vm533, %v717, 0
        %v725 = vsel %vm533, %v718, 0
        %v728 = vsel %vm533, %v719, 0
        %v731 = vsel %vm533, %v720, 0
        %733 = vmatprep.subr.bf16.mxu0 0
        %734 = vmatpush1.bf16.msra.mxu0 0
        %735 = vmatprep.subr.bf16.mxu0 0
        %736 = vmatpush1.bf16.msra.mxu0 0
        %737 = vmatprep.subr.bf16.mxu0 0
        %738 = vmatpush1.bf16.msra.mxu0 0
        %739 = vmatprep.subr.bf16.mxu0 0
        %740 = vmatpush1.bf16.msra.mxu0 0
        %741 = vmatprep.subr.bf16.mxu0 %v642
        %742 = vmatpush1.bf16.msra.mxu0 %v641
        %743 = vmatprep.subr.bf16.mxu0 %v640
        %744 = vmatpush1.bf16.msra.mxu0 %v639
        %745 = vmatprep.subr.bf16.mxu0 %v638
        %746 = vmatpush1.bf16.msra.mxu0 %v637
        %747 = vmatprep.subr.bf16.mxu0 %v636
        %748 = vmatpush1.bf16.msra.mxu0 %v635
        %749 = vmatprep.subr.bf16.mxu0 0
        %750 = vmatpush2.bf16.msra.mxu0 0
        %751 = vmatprep.subr.bf16.mxu0 0
        %752 = vmatpush2.bf16.msra.mxu0 0
        %753 = vmatprep.subr.bf16.mxu0 0
        %754 = vmatpush2.bf16.msra.mxu0 0
        %755 = vmatprep.subr.bf16.mxu0 0
        %756 = vmatpush2.bf16.msra.mxu0 0
        %757 = vmatprep.subr.bf16.mxu0 0
        %758 = vmatpush2.bf16.msra.mxu0 0
        %759 = vmatprep.subr.bf16.mxu0 0
        %760 = vmatpush2.bf16.msra.mxu0 0
        %761 = vmatprep.subr.bf16.mxu0 0
        %762 = vmatpush2.bf16.msra.mxu0 0
        %763 = vmatprep.subr.bf16.mxu0 0
        %764 = vmatpush2.bf16.msra.mxu0 0
        %765 = vmatprep.mubr.bf16.mxu0 0
        %766 = vmatmul.mubr.bf16.gmra.mxu0 %v722
        %v767 = vpop.f32.mrf.mxu0
        %v768 = vadd.f32 %v664, %v767
        %v769 = vpop.f32.mrf.mxu0
        %v770 = vadd.f32 %v664, %v769
        %v771 = vpop.f32.mrf.mxu0
        %v772 = vadd.f32 %v669, %v771
        %v773 = vpop.f32.mrf.mxu0
        %v774 = vadd.f32 %v669, %v773
        %775 = vmatprep.mubr.bf16.mxu0 0
        %776 = vmatmul.mubr.bf16.gmra.mxu0 %v725
        %v777 = vpop.f32.mrf.mxu0
        %v778 = vadd.f32 %v674, %v777
        %v779 = vpop.f32.mrf.mxu0
        %v780 = vadd.f32 %v674, %v779
        %v781 = vpop.f32.mrf.mxu0
        %v782 = vadd.f32 %v679, %v781
        %v783 = vpop.f32.mrf.mxu0
        %v784 = vadd.f32 %v679, %v783
        %785 = vmatprep.mubr.bf16.mxu0 0
        %786 = vmatmul.mubr.bf16.gmra.mxu0 %v728
        %v787 = vpop.f32.mrf.mxu0
        %v788 = vadd.f32 %v684, %v787
        %v789 = vpop.f32.mrf.mxu0
        %v790 = vadd.f32 %v684, %v789
        %v791 = vpop.f32.mrf.mxu0
        %v792 = vadd.f32 %v689, %v791
        %v793 = vpop.f32.mrf.mxu0
        %v794 = vadd.f32 %v689, %v793
        %795 = vmatprep.mubr.bf16.mxu0 0
        %796 = vmatmul.mubr.bf16.gmra.mxu0 %v731
        %v797 = vpop.f32.mrf.mxu0
        %v798 = vadd.f32 %v694, %v797
        %v799 = vpop.f32.mrf.mxu0
        %v800 = vadd.f32 %v694, %v799
        %v801 = vpop.f32.mrf.mxu0
        %v802 = vadd.f32 %v699, %v801
        %v803 = vpop.f32.mrf.mxu0
        %v804 = vadd.f32 %v699, %v803
        %805 = vdwg.mxu0
        %v806 = vmax.f32 %v768, 0.0
        %v807 = vmax.f32 %v770, 0.0
        %v808 = vmax.f32 %v772, 0.0
        %v809 = vmax.f32 %v774, 0.0
        %v810 = vmax.f32 %v778, 0.0
        %v811 = vmax.f32 %v780, 0.0
        %v812 = vmax.f32 %v782, 0.0
        %v813 = vmax.f32 %v784, 0.0
        %v814 = vmax.f32 %v788, 0.0
        %v815 = vmax.f32 %v790, 0.0
        %v816 = vmax.f32 %v792, 0.0
        %v817 = vmax.f32 %v794, 0.0
        %v818 = vmax.f32 %v798, 0.0
        %v819 = vmax.f32 %v800, 0.0
        %v820 = vmax.f32 %v802, 0.0
        %v821 = vmax.f32 %v804, 0.0
        %v822 = vpack.c.bf16 %v808, %v806
        %v823 = vpack.c.bf16 %v809, %v807
        %v824 = vpack.c.bf16 %v812, %v810
        %v825 = vpack.c.bf16 %v813, %v811
        %v826 = vpack.c.bf16 %v816, %v814
        %v827 = vpack.c.bf16 %v817, %v815
        %v828 = vpack.c.bf16 %v820, %v818
        %v829 = vpack.c.bf16 %v821, %v819
        %s830 = scalar_lea.vmem %s1, 96
        %v831 = vld [vmem:[%s830] sm:$0xf]
        %v832 = vld [vmem:[%s830 + $0x4] sm:$0xf]
        %v833 = vld [vmem:[%s830 + $0x8] sm:$0xf]
        %v834 = vld [vmem:[%s830 + $0xc] sm:$0xf]
        %v835 = vld [vmem:[%s830 + $0x10] sm:$0xf]
        %v836 = vld [vmem:[%s830 + $0x14] sm:$0xf]
        %v837 = vld [vmem:[%s830 + $0x18] sm:$0xf]
        %v838 = vld [vmem:[%s830 + $0x1c] sm:$0xf]
        %s839 = scalar_lea.vmem %s2, 192
        %v840 = vld [vmem:[%s839] sm:$0xff]
        %v841 = vld [vmem:[%s839 + $0x8] sm:$0xff]
        %v842 = vld [vmem:[%s839 + $0x10] sm:$0xff]
        %v843 = vld [vmem:[%s839 + $0x18] sm:$0xff]
        %v844 = vld [vmem:[%s839 + $0x20] sm:$0xff]
        %v845 = vld [vmem:[%s839 + $0x28] sm:$0xff]
        %v846 = vld [vmem:[%s839 + $0x30] sm:$0xff]
        %v847 = vld [vmem:[%s839 + $0x38] sm:$0xff]
        %849 = vset.pattern.permute.xlu0 0
        %850 = vperm.xlu0 %849, %v840
        %v851 = vpop.permute.xlu0 %850
        %854 = vset.pattern.permute.xlu0 0
        %855 = vperm.xlu0 %854, %v841
        %v856 = vpop.permute.xlu0 %855
        %859 = vset.pattern.permute.xlu0 0
        %860 = vperm.xlu0 %859, %v842
        %v861 = vpop.permute.xlu0 %860
        %864 = vset.pattern.permute.xlu0 0
        %865 = vperm.xlu0 %864, %v843
        %v866 = vpop.permute.xlu0 %865
        %869 = vset.pattern.permute.xlu0 0
        %870 = vperm.xlu0 %869, %v844
        %v871 = vpop.permute.xlu0 %870
        %874 = vset.pattern.permute.xlu0 0
        %875 = vperm.xlu0 %874, %v845
        %v876 = vpop.permute.xlu0 %875
        %879 = vset.pattern.permute.xlu0 0
        %880 = vperm.xlu0 %879, %v846
        %v881 = vpop.permute.xlu0 %880
        %884 = vset.pattern.permute.xlu0 0
        %885 = vperm.xlu0 %884, %v847
        %v886 = vpop.permute.xlu0 %885
        %v896 = vunpack.c.l.b16 %v831
        %v897 = vunpack.c.l.b16 %v832
        %v898 = vunpack.c.l.b16 %v833
        %v899 = vunpack.c.l.b16 %v834
        %v900 = vunpack.c.l.b16 %v835
        %v901 = vunpack.c.l.b16 %v836
        %v902 = vunpack.c.l.b16 %v837
        %v903 = vunpack.c.l.b16 %v838
        %v904 = vpack.c.b16 %v897, %v896
        %v905 = vpack.c.b16 %v899, %v898
        %v906 = vpack.c.b16 %v901, %v900
        %v907 = vpack.c.b16 %v903, %v902
        %v909 = vsel %vm533, %v904, 0
        %v912 = vsel %vm533, %v905, 0
        %v915 = vsel %vm533, %v906, 0
        %v918 = vsel %vm533, %v907, 0
        %920 = vmatprep.subr.bf16.mxu0 0
        %921 = vmatpush1.bf16.msra.mxu0 0
        %922 = vmatprep.subr.bf16.mxu0 0
        %923 = vmatpush1.bf16.msra.mxu0 0
        %924 = vmatprep.subr.bf16.mxu0 0
        %925 = vmatpush1.bf16.msra.mxu0 0
        %926 = vmatprep.subr.bf16.mxu0 0
        %927 = vmatpush1.bf16.msra.mxu0 0
        %928 = vmatprep.subr.bf16.mxu0 %v829
        %929 = vmatpush1.bf16.msra.mxu0 %v828
        %930 = vmatprep.subr.bf16.mxu0 %v827
        %931 = vmatpush1.bf16.msra.mxu0 %v826
        %932 = vmatprep.subr.bf16.mxu0 %v825
        %933 = vmatpush1.bf16.msra.mxu0 %v824
        %934 = vmatprep.subr.bf16.mxu0 %v823
        %935 = vmatpush1.bf16.msra.mxu0 %v822
        %936 = vmatprep.subr.bf16.mxu0 0
        %937 = vmatpush2.bf16.msra.mxu0 0
        %938 = vmatprep.subr.bf16.mxu0 0
        %939 = vmatpush2.bf16.msra.mxu0 0
        %940 = vmatprep.subr.bf16.mxu0 0
        %941 = vmatpush2.bf16.msra.mxu0 0
        %942 = vmatprep.subr.bf16.mxu0 0
        %943 = vmatpush2.bf16.msra.mxu0 0
        %944 = vmatprep.subr.bf16.mxu0 0
        %945 = vmatpush2.bf16.msra.mxu0 0
        %946 = vmatprep.subr.bf16.mxu0 0
        %947 = vmatpush2.bf16.msra.mxu0 0
        %948 = vmatprep.subr.bf16.mxu0 0
        %949 = vmatpush2.bf16.msra.mxu0 0
        %950 = vmatprep.subr.bf16.mxu0 0
        %951 = vmatpush2.bf16.msra.mxu0 0
        %952 = vmatprep.mubr.bf16.mxu0 0
        %953 = vmatmul.mubr.bf16.gmra.mxu0 %v909
        %v954 = vpop.f32.mrf.mxu0
        %v955 = vadd.f32 %v851, %v954
        %v956 = vpop.f32.mrf.mxu0
        %v957 = vadd.f32 %v851, %v956
        %v958 = vpop.f32.mrf.mxu0
        %v959 = vadd.f32 %v856, %v958
        %v960 = vpop.f32.mrf.mxu0
        %v961 = vadd.f32 %v856, %v960
        %962 = vmatprep.mubr.bf16.mxu0 0
        %963 = vmatmul.mubr.bf16.gmra.mxu0 %v912
        %v964 = vpop.f32.mrf.mxu0
        %v965 = vadd.f32 %v861, %v964
        %v966 = vpop.f32.mrf.mxu0
        %v967 = vadd.f32 %v861, %v966
        %v968 = vpop.f32.mrf.mxu0
        %v969 = vadd.f32 %v866, %v968
        %v970 = vpop.f32.mrf.mxu0
        %v971 = vadd.f32 %v866, %v970
        %972 = vmatprep.mubr.bf16.mxu0 0
        %973 = vmatmul.mubr.bf16.gmra.mxu0 %v915
        %v974 = vpop.f32.mrf.mxu0
        %v975 = vadd.f32 %v871, %v974
        %v976 = vpop.f32.mrf.mxu0
        %v977 = vadd.f32 %v871, %v976
        %v978 = vpop.f32.mrf.mxu0
        %v979 = vadd.f32 %v876, %v978
        %v980 = vpop.f32.mrf.mxu0
        %v981 = vadd.f32 %v876, %v980
        %982 = vmatprep.mubr.bf16.mxu0 0
        %983 = vmatmul.mubr.bf16.gmra.mxu0 %v918
        %v984 = vpop.f32.mrf.mxu0
        %v985 = vadd.f32 %v881, %v984
        %v986 = vpop.f32.mrf.mxu0
        %v987 = vadd.f32 %v881, %v986
        %v988 = vpop.f32.mrf.mxu0
        %v989 = vadd.f32 %v886, %v988
        %v990 = vpop.f32.mrf.mxu0
        %v991 = vadd.f32 %v886, %v990
        %992 = vdwg.mxu0
        %v993 = vmax.f32 %v955, 0.0
        %v994 = vmax.f32 %v957, 0.0
        %v995 = vmax.f32 %v959, 0.0
        %v996 = vmax.f32 %v961, 0.0
        %v997 = vmax.f32 %v965, 0.0
        %v998 = vmax.f32 %v967, 0.0
        %v999 = vmax.f32 %v969, 0.0
        %v1000 = vmax.f32 %v971, 0.0
        %v1001 = vmax.f32 %v975, 0.0
        %v1002 = vmax.f32 %v977, 0.0
        %v1003 = vmax.f32 %v979, 0.0
        %v1004 = vmax.f32 %v981, 0.0
        %v1005 = vmax.f32 %v985, 0.0
        %v1006 = vmax.f32 %v987, 0.0
        %v1007 = vmax.f32 %v989, 0.0
        %v1008 = vmax.f32 %v991, 0.0
        %v1009 = vpack.c.bf16 %v995, %v993
        %v1010 = vpack.c.bf16 %v996, %v994
        %v1011 = vpack.c.bf16 %v999, %v997
        %v1012 = vpack.c.bf16 %v1000, %v998
        %v1013 = vpack.c.bf16 %v1003, %v1001
        %v1014 = vpack.c.bf16 %v1004, %v1002
        %v1015 = vpack.c.bf16 %v1007, %v1005
        %v1016 = vpack.c.bf16 %v1008, %v1006
        %s1017 = scalar_lea.vmem %s1, 128
        %v1018 = vld [vmem:[%s1017] sm:$0xf]
        %v1019 = vld [vmem:[%s1017 + $0x4] sm:$0xf]
        %v1020 = vld [vmem:[%s1017 + $0x8] sm:$0xf]
        %v1021 = vld [vmem:[%s1017 + $0xc] sm:$0xf]
        %v1022 = vld [vmem:[%s1017 + $0x10] sm:$0xf]
        %v1023 = vld [vmem:[%s1017 + $0x14] sm:$0xf]
        %v1024 = vld [vmem:[%s1017 + $0x18] sm:$0xf]
        %v1025 = vld [vmem:[%s1017 + $0x1c] sm:$0xf]
        %s1026 = scalar_lea.vmem %s2, 256
        %v1027 = vld [vmem:[%s1026] sm:$0xff]
        %v1028 = vld [vmem:[%s1026 + $0x8] sm:$0xff]
        %v1029 = vld [vmem:[%s1026 + $0x10] sm:$0xff]
        %v1030 = vld [vmem:[%s1026 + $0x18] sm:$0xff]
        %v1031 = vld [vmem:[%s1026 + $0x20] sm:$0xff]
        %v1032 = vld [vmem:[%s1026 + $0x28] sm:$0xff]
        %v1033 = vld [vmem:[%s1026 + $0x30] sm:$0xff]
        %v1034 = vld [vmem:[%s1026 + $0x38] sm:$0xff]
        %1036 = vset.pattern.permute.xlu0 0
        %1037 = vperm.xlu0 %1036, %v1027
        %v1038 = vpop.permute.xlu0 %1037
        %1041 = vset.pattern.permute.xlu0 0
        %1042 = vperm.xlu0 %1041, %v1028
        %v1043 = vpop.permute.xlu0 %1042
        %1045 = vset.pattern.permute.xlu0 0
        %1046 = vperm.xlu0 %1045, %v1029
        %v1047 = vpop.permute.xlu0 %1046
        %1049 = vset.pattern.permute.xlu0 0
        %1050 = vperm.xlu0 %1049, %v1030
        %v1051 = vpop.permute.xlu0 %1050
        %1053 = vset.pattern.permute.xlu0 0
        %1054 = vperm.xlu0 %1053, %v1031
        %v1055 = vpop.permute.xlu0 %1054
        %1057 = vset.pattern.permute.xlu0 0
        %1058 = vperm.xlu0 %1057, %v1032
        %v1059 = vpop.permute.xlu0 %1058
        %1061 = vset.pattern.permute.xlu0 0
        %1062 = vperm.xlu0 %1061, %v1033
        %v1063 = vpop.permute.xlu0 %1062
        %1065 = vset.pattern.permute.xlu0 0
        %1066 = vperm.xlu0 %1065, %v1034
        %v1067 = vpop.permute.xlu0 %1066
        %v1076 = vunpack.c.l.b16 %v1018
        %v1077 = vunpack.c.l.b16 %v1019
        %v1078 = vunpack.c.l.b16 %v1020
        %v1079 = vunpack.c.l.b16 %v1021
        %v1080 = vunpack.c.l.b16 %v1022
        %v1081 = vunpack.c.l.b16 %v1023
        %v1082 = vunpack.c.l.b16 %v1024
        %v1083 = vunpack.c.l.b16 %v1025
        %v1084 = vpack.c.b16 %v1077, %v1076
        %v1085 = vpack.c.b16 %v1079, %v1078
        %v1086 = vpack.c.b16 %v1081, %v1080
        %v1087 = vpack.c.b16 %v1083, %v1082
        %v1089 = vsel %vm533, %v1084, 0
        %v1092 = vsel %vm533, %v1085, 0
        %v1095 = vsel %vm533, %v1086, 0
        %v1098 = vsel %vm533, %v1087, 0
        %1100 = vmatprep.subr.bf16.mxu0 0
        %1101 = vmatpush1.bf16.msra.mxu0 0
        %1102 = vmatprep.subr.bf16.mxu0 0
        %1103 = vmatpush1.bf16.msra.mxu0 0
        %1104 = vmatprep.subr.bf16.mxu0 0
        %1105 = vmatpush1.bf16.msra.mxu0 0
        %1106 = vmatprep.subr.bf16.mxu0 0
        %1107 = vmatpush1.bf16.msra.mxu0 0
        %1108 = vmatprep.subr.bf16.mxu0 %v1016
        %1109 = vmatpush1.bf16.msra.mxu0 %v1015
        %1110 = vmatprep.subr.bf16.mxu0 %v1014
        %1111 = vmatpush1.bf16.msra.mxu0 %v1013
        %1112 = vmatprep.subr.bf16.mxu0 %v1012
        %1113 = vmatpush1.bf16.msra.mxu0 %v1011
        %1114 = vmatprep.subr.bf16.mxu0 %v1010
        %1115 = vmatpush1.bf16.msra.mxu0 %v1009
        %1116 = vmatprep.subr.bf16.mxu0 0
        %1117 = vmatpush2.bf16.msra.mxu0 0
        %1118 = vmatprep.subr.bf16.mxu0 0
        %1119 = vmatpush2.bf16.msra.mxu0 0
        %1120 = vmatprep.subr.bf16.mxu0 0
        %1121 = vmatpush2.bf16.msra.mxu0 0
        %1122 = vmatprep.subr.bf16.mxu0 0
        %1123 = vmatpush2.bf16.msra.mxu0 0
        %1124 = vmatprep.subr.bf16.mxu0 0
        %1125 = vmatpush2.bf16.msra.mxu0 0
        %1126 = vmatprep.subr.bf16.mxu0 0
        %1127 = vmatpush2.bf16.msra.mxu0 0
        %1128 = vmatprep.subr.bf16.mxu0 0
        %1129 = vmatpush2.bf16.msra.mxu0 0
        %1130 = vmatprep.subr.bf16.mxu0 0
        %1131 = vmatpush2.bf16.msra.mxu0 0
        %1132 = vmatprep.mubr.bf16.mxu0 0
        %1133 = vmatmul.mubr.bf16.gmra.mxu0 %v1089
        %v1134 = vpop.f32.mrf.mxu0
        %v1135 = vadd.f32 %v1038, %v1134
        %v1136 = vpop.f32.mrf.mxu0
        %v1137 = vadd.f32 %v1038, %v1136
        %v1138 = vpop.f32.mrf.mxu0
        %v1139 = vpop.f32.mrf.mxu0
        %1140 = vmatprep.mubr.bf16.mxu0 0
        %1141 = vmatmul.mubr.bf16.gmra.mxu0 %v1092
        %v1142 = vpop.f32.mrf.mxu0
        %v1143 = vpop.f32.mrf.mxu0
        %v1144 = vpop.f32.mrf.mxu0
        %v1145 = vpop.f32.mrf.mxu0
        %1146 = vmatprep.mubr.bf16.mxu0 0
        %1147 = vmatmul.mubr.bf16.gmra.mxu0 %v1095
        %v1148 = vpop.f32.mrf.mxu0
        %v1149 = vpop.f32.mrf.mxu0
        %v1150 = vpop.f32.mrf.mxu0
        %v1151 = vpop.f32.mrf.mxu0
        %1152 = vmatprep.mubr.bf16.mxu0 0
        %1153 = vmatmul.mubr.bf16.gmra.mxu0 %v1098
        %v1154 = vpop.f32.mrf.mxu0
        %v1155 = vpop.f32.mrf.mxu0
        %v1156 = vpop.f32.mrf.mxu0
        %v1157 = vpop.f32.mrf.mxu0
        %1158 = vdwg.mxu0
        %v1161 = vcombine.low %v1135, %v1137
        %v1163 = vunpack.c.l.s4 1966171168
        %v1164 = vunpack.c.0.s8 %v1163
        %v1165 = vlaneseq
        %v1166 = vshrl.u32 %v1165, 7
        %v1167 = vsub.s32 %v1164, %v1166
        %v1168 = vrot.slane %v1161, %v1167
        %v1170 = vunpack.c.l.s4 1966171168
        %v1171 = vunpack.c.0.s8 %v1170
        %v1172 = vlaneseq
        %v1173 = vshrl.u32 %v1172, 7
        %v1174 = vsub.s32 %v1171, %v1173
        %v1175 = vrot.slane %v1168, %v1174
        %v1177 = vlaneseq
        %vm1178 = vcmp.ge.s32.totalorder %v1177, 0
        %vm1179 = vcmp.lt.s32.totalorder %v1177, 256
        %vm1180 = vmand %vm1178, %vm1179
        %1181 = vst.msk [vmem:[%s164] sm:$0x3] %vm1180, %v1175
        %s1182 = sand.u32 %s93, 1
        %s1183 = scalar_lea.sflag [#allocation3], %s1182
        %s1184 = sand.u32 %s93, 1
        %s1185 = smul.addr %s1184, 2
        %s1186 = scalar_lea.vmem [#allocation2], %s1185
        // Predicated region
        $region33: #{_forward.1} parent=31 // pred_check
          %p1187 = pneg %p103
        $region34: #{_forward.1} parent=31 // pred_check_branch
          %1189 = sbr.rel (%p1187) target = $region36
        $region35: #{_forward.1} parent=31 // pred_region
          %s1190 = smul.u32 2, %s17
          %s1192 = ssub.s32 32, 32
          %1193 = vsyncadd %s1183, %s1192
          %s1194 = smul.addr %s1190, 16
          %s1195 = scalar_lea.hbm %s3, %s1194
          %s1197 = sshll.u32 %s1186, 4
          %s1198 = int_to_ptr.vmem [resolvable:$true] %s1197
          %1200 = dma.vmem_to_hbm [thread:$0]  %s1198, 32, %s1195, %s1183
        $region36: #{_forward.1} parent=31 // pred_fallthru
          _
      $region32: #{_forward.1} parent=5 // pred_fallthru
        _
      %p1201 = scmp.le.s32.totalorder 2, %s12
      // Predicated region
      $region37: #{_forward.1} parent=5 // pred_check
        %p1202 = pneg %p1201
      $region38: #{_forward.1} parent=5 // pred_check_branch
        %1204 = sbr.rel (%p1202) target = $region40
      $region39: #{_forward.1} parent=5 // pred_region
        %s1205 = ssub.s32 %s12, 2
        // Predicated region
        $region41: #{_forward.1} parent=39 // pred_check
          %p1206 = pneg %p109
        $region42: #{_forward.1} parent=39 // pred_check_branch
          %1208 = sbr.rel (%p1206) target = $region44
        $region43: #{_forward.1} parent=39 // pred_region
          %s1209 = sand.u32 %s94, 1
          %s1210 = scalar_lea.sflag [#allocation3], %s1209
          %s1211 = sand.u32 %s94, 1
          %s1212 = smul.addr %s1211, 2
          %s1213 = scalar_lea.vmem [#allocation2], %s1212
          %1214 = dma.done %s1210, 32
        $region44: #{_forward.1} parent=39 // pred_fallthru
          _
      $region40: #{_forward.1} parent=5 // pred_fallthru
        _
    $region6: #{_forward.1} parent=1 // loop_footer
      %s16 = sadd.s32 1, %s12
    $region7: #{_forward.1} parent=1 // loop_footer_branch
      %11 = sbr.rel target = $region3
    $region8: #{_forward.1} parent=1 // loop_exit
      _
    %1215 = vsyncpa [#allocation3], 1
    %s1216 = scalar_lea.sflag [#allocation3], 1
    %1217 = vsyncpa %s1216, 1

</llo_original>
